<compile_context>
chip_gen: v7x
topology: tpu7x:2x2x1
jax: 0.10.0
libtpu: 0.0.40
codegen_flags: <defaults>
</compile_context>

<pallas_src>
import functools

import jax
import jax.numpy as jnp
from jax.experimental import pallas as pl
from jax.experimental.pallas import tpu as pltpu


def _round_up(x, m):
    return (x + m - 1) // m * m


def _cdiv(a, b):
    return (a + b - 1) // b


def _choose_tile_b(batch, cap):
    """Pick the batch-tile (sublane) size.

    - batch < 8: single block equal to the array dim (allowed by BlockSpec rules).
    - batch < 256: one sublane-aligned tile.
    - batch >= 256: at least 2 tiles so v7x's second TensorCore gets work,
      capped by `cap` for VMEM headroom.
    """
    if batch < 8:
        return batch
    if batch < 256:
        return _round_up(batch, 8)
    return min(cap, _round_up(_cdiv(batch, 2), 128))


def dqn_snake_kernel(w_ref, x_ref, o_ref, *, input_dim, hidden_dim, output_dim):
    """One batch tile. x_ref: (TILE_B, input_dim), o_ref: (TILE_B, output_dim).

    w_ref is a single packed slab (rows, 128):
        rows [0 : IN)            = W1^T (IN, H)
        rows [IN : IN+H)         = W2^T (H, H)
        rows [IN+H : IN+2H)      = W3^T (H, O)
        row  IN+2H               = b1   (H,)
        row  IN+2H+1             = b2   (H,)
        row  IN+2H+2             = b3   (O,)
    Biases are (1, features) rows that broadcast along the batch (sublane) axis.
    """
    IN, H, O = input_dim, hidden_dim, output_dim
    r_w2 = IN
    r_w3 = IN + H
    r_b = IN + 2 * H

    x = x_ref[...]                                   # (TB, IN) f32

    w1t = w_ref[0:IN, 0:H]                           # (IN, H)
    w2t = w_ref[r_w2:r_w2 + H, 0:H]                  # (H, H)
    w3t = w_ref[r_w3:r_w3 + H, 0:O]                  # (H, O)
    b1 = w_ref[r_b:r_b + 1, 0:H]                     # (1, H)
    b2 = w_ref[r_b + 1:r_b + 2, 0:H]                 # (1, H)
    b3 = w_ref[r_b + 2:r_b + 3, 0:O]                 # (1, O)

    # Layer 1: x @ W1^T + b1, ReLU
    h1 = jnp.dot(x, w1t, preferred_element_type=jnp.float32) + b1
    h1 = jnp.maximum(h1, 0.0)                        # (TB, H)

    # Layer 2: h1 @ W2^T + b2, ReLU
    h2 = jnp.dot(h1, w2t, preferred_element_type=jnp.float32) + b2
    h2 = jnp.maximum(h2, 0.0)                        # (TB, H)

    # Layer 3: h2 @ W3^T + b3
    out = jnp.dot(h2, w3t, preferred_element_type=jnp.float32) + b3
    o_ref[...] = out.astype(o_ref.dtype)             # (TB, O)


def dqn_snake_forward(x, params, *, tile_b_cap=4096):
    """DQNSnake MLP forward pass via a single Pallas kernel, gridded over batch.

    x: (B, input_dim) float array.  Returns (B, output_dim) float32.
    tile_b_cap should be a multiple of 128.
    """
    w1, b1, w2, b2, w3, b3 = params
    batch, input_dim = x.shape
    hidden_dim = w1.shape[0]
    output_dim = w3.shape[0]

    # ---- pack W^T's and biases into one (8,128)-aligned VMEM slab ----
    lane_w = _round_up(max(hidden_dim, output_dim), 128)
    n_rows = _round_up(input_dim + 2 * hidden_dim + 3, 8)
    r_w2 = input_dim
    r_w3 = input_dim + hidden_dim
    r_b = input_dim + 2 * hidden_dim

    slab = jnp.zeros((n_rows, lane_w), jnp.float32)
    slab = slab.at[0:input_dim, 0:hidden_dim].set(w1.astype(jnp.float32).T)
    slab = slab.at[r_w2:r_w2 + hidden_dim, 0:hidden_dim].set(w2.astype(jnp.float32).T)
    slab = slab.at[r_w3:r_w3 + hidden_dim, 0:output_dim].set(w3.astype(jnp.float32).T)
    slab = slab.at[r_b, 0:hidden_dim].set(b1.astype(jnp.float32))
    slab = slab.at[r_b + 1, 0:hidden_dim].set(b2.astype(jnp.float32))
    slab = slab.at[r_b + 2, 0:output_dim].set(b3.astype(jnp.float32))

    x = x.astype(jnp.float32)   # no-op for f32 inputs; no layout change / no pad

    tile_b = _choose_tile_b(batch, tile_b_cap)
    grid = (_cdiv(batch, tile_b),)

    kernel = functools.partial(
        dqn_snake_kernel,
        input_dim=input_dim, hidden_dim=hidden_dim, output_dim=output_dim)

    out = pl.pallas_call(
        kernel,
        out_shape=jax.ShapeDtypeStruct((batch, output_dim), jnp.float32),
        grid_spec=pltpu.PrefetchScalarGridSpec(
            num_scalar_prefetch=0,
            grid=grid,
            in_specs=[
                # Parameter slab: constant block index -> DMA'd once, VMEM-resident.
                pl.BlockSpec((n_rows, lane_w), lambda i: (0, 0)),
                # Activations: tiled along batch (sublane) axis, double-buffered.
                pl.BlockSpec((tile_b, input_dim), lambda i: (i, 0)),
            ],
            out_specs=pl.BlockSpec((tile_b, output_dim), lambda i: (i, 0)),
        ),
        compiler_params=pltpu.CompilerParams(
            dimension_semantics=("parallel",),        # batch tiles split across TCs on v7x
            vmem_limit_bytes=48 * 1024 * 1024),       # fits v5e/v6e/v7x; actual use ~14 MiB
    )(slab, x)

    return out


def init_params(key, input_dim, hidden_dim, output_dim):
    """Deterministic parameter init mirroring PyTorch Linear shapes:
    W_i has shape (out_features, in_features), b_i has shape (out_features,)."""
    keys = jax.random.split(key, 6)
    scale1 = 1.0 / jnp.sqrt(input_dim)
    scale2 = 1.0 / jnp.sqrt(hidden_dim)
    w1 = jax.random.uniform(keys[0], (hidden_dim, input_dim), jnp.float32, -scale1, scale1)
    b1 = jax.random.uniform(keys[1], (hidden_dim,), jnp.float32, -scale1, scale1)
    w2 = jax.random.uniform(keys[2], (hidden_dim, hidden_dim), jnp.float32, -scale2, scale2)
    b2 = jax.random.uniform(keys[3], (hidden_dim,), jnp.float32, -scale2, scale2)
    w3 = jax.random.uniform(keys[4], (output_dim, hidden_dim), jnp.float32, -scale2, scale2)
    b3 = jax.random.uniform(keys[5], (output_dim,), jnp.float32, -scale2, scale2)
    return (w1, b1, w2, b2, w3, b3)


def reference_forward(x, params):
    """Pure-JAX reference matching the PyTorch semantics."""
    w1, b1, w2, b2, w3, b3 = params
    h1 = jnp.maximum(x @ w1.T + b1, 0.0)
    h2 = jnp.maximum(h1 @ w2.T + b2, 0.0)
    return h2 @ w3.T + b3


if __name__ == "__main__":
    INPUT_DIM = 16    # state-feature vector size
    HIDDEN_DIM = 24   # fixed by the module definition
    OUTPUT_DIM = 4    # snake actions
    BATCH = 8

    key = jax.random.PRNGKey(0)
    k_x, k_p, k_x2 = jax.random.split(key, 3)
    x = jax.random.normal(k_x, (BATCH, INPUT_DIM), jnp.float32)
    params = init_params(k_p, INPUT_DIM, HIDDEN_DIM, OUTPUT_DIM)

    # Small-batch path (single sublane-aligned tile, grid = 1).
    out = jax.block_until_ready(dqn_snake_forward(x, params))
    ref = reference_forward(x, params)
    assert out.shape == (BATCH, OUTPUT_DIM), out.shape
    assert jnp.allclose(out, ref, atol=1e-5, rtol=1e-5), "mismatch vs reference (B=8)"

    # Multi-tile / ragged-batch path (grid = 2, partial last block handled by
    # Pallas boundary masking, no explicit padding).
    x2 = jax.random.normal(k_x2, (300, INPUT_DIM), jnp.float32)
    out2 = jax.block_until_ready(dqn_snake_forward(x2, params))
    ref2 = reference_forward(x2, params)
    assert out2.shape == (300, OUTPUT_DIM), out2.shape
    assert jnp.allclose(out2, ref2, atol=1e-5, rtol=1e-5), "mismatch vs reference (B=300)"

    print("KERNEL_OK")
</pallas_src>

<mosaic_0001>
module attributes {stable_mosaic.version = 11 : i64} {
  func.func @dqn_snake_kernel(%arg0: i32, %arg1: memref<72x128xf32, #tpu.memory_space<vmem>>, %arg2: memref<8x16xf32, #tpu.memory_space<vmem>>, %arg3: memref<8x4xf32, #tpu.memory_space<vmem>>) attributes {dimension_semantics = [#tpu.dimension_semantics<parallel>], iteration_bounds = array<i64: 1>, scalar_prefetch = 0 : i64, scratch_operands = 0 : i64, tpu.core_type = #tpu.core_type<tc>, window_params = [{pipeline_mode = #tpu.pipeline_mode<synchronous>, transform_indices = @transform_0, window_bounds = array<i64: 72, 128>}, {transform_indices = @transform_1, window_bounds = array<i64: 8, 16>}, {transform_indices = @transform_2, window_bounds = array<i64: 8, 4>}]} {
    %c0 = arith.constant 0 : index
    %c0_0 = arith.constant 0 : index
    %0 = vector.load %arg2[%c0, %c0_0] : memref<8x16xf32, #tpu.memory_space<vmem>>, vector<8x16xf32>
    %c0_1 = arith.constant 0 : index
    %c0_2 = arith.constant 0 : index
    %1 = vector.load %arg1[%c0_1, %c0_2] : memref<72x128xf32, #tpu.memory_space<vmem>>, vector<16x24xf32>
    %c16 = arith.constant 16 : index
    %c0_3 = arith.constant 0 : index
    %2 = vector.load %arg1[%c16, %c0_3] : memref<72x128xf32, #tpu.memory_space<vmem>>, vector<24x24xf32>
    %c40 = arith.constant 40 : index
    %c0_4 = arith.constant 0 : index
    %3 = vector.load %arg1[%c40, %c0_4] : memref<72x128xf32, #tpu.memory_space<vmem>>, vector<24x4xf32>
    %c64 = arith.constant 64 : index
    %c0_5 = arith.constant 0 : index
    %4 = vector.load %arg1[%c64, %c0_5] : memref<72x128xf32, #tpu.memory_space<vmem>>, vector<1x24xf32>
    %c65 = arith.constant 65 : index
    %c0_6 = arith.constant 0 : index
    %5 = vector.load %arg1[%c65, %c0_6] : memref<72x128xf32, #tpu.memory_space<vmem>>, vector<1x24xf32>
    %c66 = arith.constant 66 : index
    %c0_7 = arith.constant 0 : index
    %6 = vector.load %arg1[%c66, %c0_7] : memref<72x128xf32, #tpu.memory_space<vmem>>, vector<1x4xf32>
    %cst = arith.constant dense<0.000000e+00> : vector<8x24xf32>
    %7 = tpu.matmul %0, %1, %cst {dimension_numbers = #tpu.dot_dimension_numbers<[1], [0], [0], [1], [0, 0, 1, 1], [], []>} : vector<8x16xf32>, vector<16x24xf32>, vector<8x24xf32> -> vector<8x24xf32>
    %8 = vector.broadcast %4 : vector<1x24xf32> to vector<8x24xf32>
    %9 = arith.addf %7, %8 : vector<8x24xf32>
    %cst_8 = arith.constant 0.000000e+00 : f32
    %10 = vector.broadcast %cst_8 : f32 to vector<8x24xf32>
    %11 = arith.maximumf %9, %10 : vector<8x24xf32>
    %cst_9 = arith.constant dense<0.000000e+00> : vector<8x24xf32>
    %12 = tpu.matmul %11, %2, %cst_9 {dimension_numbers = #tpu.dot_dimension_numbers<[1], [0], [0], [1], [0, 0, 1, 1], [], []>} : vector<8x24xf32>, vector<24x24xf32>, vector<8x24xf32> -> vector<8x24xf32>
    %13 = vector.broadcast %5 : vector<1x24xf32> to vector<8x24xf32>
    %14 = arith.addf %12, %13 : vector<8x24xf32>
    %cst_10 = arith.constant 0.000000e+00 : f32
    %15 = vector.broadcast %cst_10 : f32 to vector<8x24xf32>
    %16 = arith.maximumf %14, %15 : vector<8x24xf32>
    %cst_11 = arith.constant dense<0.000000e+00> : vector<8x4xf32>
    %17 = tpu.matmul %16, %3, %cst_11 {dimension_numbers = #tpu.dot_dimension_numbers<[1], [0], [0], [1], [0, 0, 1, 1], [], []>} : vector<8x24xf32>, vector<24x4xf32>, vector<8x4xf32> -> vector<8x4xf32>
    %18 = vector.broadcast %6 : vector<1x4xf32> to vector<8x4xf32>
    %19 = arith.addf %17, %18 : vector<8x4xf32>
    %c0_12 = arith.constant 0 : index
    %c0_13 = arith.constant 0 : index
    %20 = vector.load %arg3[%c0_12, %c0_13] : memref<8x4xf32, #tpu.memory_space<vmem>>, vector<8x4xf32>
    tpu.vector_store %arg3[%c0_12, %c0_13], %19 {strides = array<i32>} : memref<8x4xf32, #tpu.memory_space<vmem>>, vector<8x4xf32>,
    return
  }
  func.func @transform_0(%arg0: i32) -> (i32, i32) {
    %c0_i32 = arith.constant 0 : i32
    %c0_i32_0 = arith.constant 0 : i32
    %c0_i32_1 = arith.constant 0 : i32
    return %c0_i32, %c0_i32_0 : i32, i32
  }
  func.func @transform_1(%arg0: i32) -> (i32, i32) {
    %c0_i32 = arith.constant 0 : i32
    %c0_i32_0 = arith.constant 0 : i32
    return %arg0, %c0_i32 : i32, i32
  }
  func.func @transform_2(%arg0: i32) -> (i32, i32) {
    %c0_i32 = arith.constant 0 : i32
    %c0_i32_0 = arith.constant 0 : i32
    return %arg0, %c0_i32 : i32, i32
  }
}

</mosaic_0001>

<llo_original>
// kernel: tpu_custom_call.1
$region0: #{tpu_custom_call.1}
  #allocation0 [shape = 'u32[]', space=smem, size = 0x4, offset = 0x4, fixed_abs, tag = 'smem constant byte address 0x4 - core index']
  #allocation1 [shape = 'u32[144,128]{1,0:T(1,128)}', space=vmem, size = 0x12000, scoped, tag = 'internal scratch']
  %s0 = inlined_call_operand.hbm [shape: f32[72,128], index: 0, kind: input, shape index: {}]
  %s1 = inlined_call_operand.hbm [shape: f32[8,16], index: 1, kind: input, shape index: {}]
  %s2 = inlined_call_operand.vmem [shape: f32[8,4], index: 2, kind: output, shape index: {}]
  %s3 = sld [smem:[#allocation0]]
  $region26: #{tpu_custom_call.1} parent=0
    _
  %s5 = ssub.s32 1, %s3
  %s6 = scalar_select 0, %s5, %s3
  $region1: #{tpu_custom_call.1} parent=0
    #allocation2 [shape = 'u8[36864]{0}', space=vmem, size = 0x9000, scoped, tag = 'input window, operand 0, single buffered']
    #allocation3 [shape = 's32[1]{0}', space=sflag, size = 0x4, scoped, tag = 'scoped memory for tpu_custom_call.1']
    #allocation4 [shape = 'u8[4096]{0}', space=vmem, size = 0x1000, scoped, tag = 'input window, operand 1, single buffered']
    #allocation5 [shape = 's32[1]{0}', space=sflag, size = 0x4, scoped, tag = 'scoped memory for tpu_custom_call.1']
    %7 = vsyncpa [#allocation3], 0
    %8 = vsyncpa [#allocation5], 0
    // Predicated region
    $region2: #{tpu_custom_call.1} parent=1 // pred_check
      _
    $region3: #{tpu_custom_call.1} parent=1 // pred_check_branch
      %10 = sbr.rel (0) target = $region5
    $region4: #{tpu_custom_call.1} parent=1 // pred_region
      %s12 = ssub.s32 1152, 1152
      %13 = vsyncadd [#allocation3], %s12
      %s14 = sshll.u32 [#allocation2], 4
      %s15 = int_to_ptr.vmem [resolvable:$true] %s14
      %20 = dma.hbm_to_vmem [thread:$0]  %s0, 1152, %s15, [#allocation3], 128, 128, 8
    $region5: #{tpu_custom_call.1} parent=1 // pred_fallthru
      _
    // Predicated region
    $region6: #{tpu_custom_call.1} parent=1 // pred_check
      _
    $region7: #{tpu_custom_call.1} parent=1 // pred_check_branch
      %22 = sbr.rel (0) target = $region9
    $region8: #{tpu_custom_call.1} parent=1 // pred_region
      %s24 = ssub.s32 128, 128
      %25 = vsyncadd [#allocation5], %s24
      %s27 = sshll.u32 [#allocation4], 4
      %s28 = int_to_ptr.vmem [resolvable:$true] %s27
      %30 = dma.hbm_to_vmem [thread:$0]  %s1, 128, %s28, [#allocation5]
    $region9: #{tpu_custom_call.1} parent=1 // pred_fallthru
      _
    // Predicated region
    $region10: #{tpu_custom_call.1} parent=1 // pred_check
      _
    $region11: #{tpu_custom_call.1} parent=1 // pred_check_branch
      %32 = sbr.rel (0) target = $region13
    $region12: #{tpu_custom_call.1} parent=1 // pred_region
      %33 = dma.done [#allocation3], 1152
    $region13: #{tpu_custom_call.1} parent=1 // pred_fallthru
      _
    // Predicated region
    $region14: #{tpu_custom_call.1} parent=1 // pred_check
      _
    $region15: #{tpu_custom_call.1} parent=1 // pred_check_branch
      %35 = sbr.rel (0) target = $region17
    $region16: #{tpu_custom_call.1} parent=1 // pred_region
      %36 = dma.done [#allocation5], 128
    $region17: #{tpu_custom_call.1} parent=1 // pred_fallthru
      _
    %v37 = vld [vmem:[#allocation4] sm:$0xff]
    %v38 = vld [vmem:[#allocation2] sm:$0xff]
    %v39 = vld [vmem:[#allocation2 + $0x8] sm:$0xff]
    %v40 = vld [vmem:[#allocation2 + $0x10] sm:$0xff]
    %v41 = vld [vmem:[#allocation2 + $0x18] sm:$0xff]
    %v42 = vld [vmem:[#allocation2 + $0x20] sm:$0xff]
    %v43 = vld [vmem:[#allocation2 + $0x28] sm:$0xff]
    %v44 = vld [vmem:[#allocation2 + $0x30] sm:$0xff]
    %v45 = vld [vmem:[#allocation2 + $0x38] sm:$0xff]
    %v46 = vld [vmem:[#allocation2 + $0x40] sm:$0x1]
    %v47 = vld [vmem:[#allocation2 + $0x41] sm:$0x1]
    %v48 = vld [vmem:[#allocation2 + $0x42] sm:$0x1]
    %v49 = vlaneseq
    %v50 = vshrl.u32 %v49, 7
    %v51 = vsub.s32 0, %v50
    %v52 = vrot.slane %v46, %v51
    %vm53 = vcmask 130048
    %v55 = vsel %vm53, %v37, 0
    %57 = vmatprep.subr.mxu0 0.0
    %58 = vmatpush1.msra.mxu0 %v38
    %59 = vmatprep.subr.mxu0 0.0
    %60 = vmatpush1.msra.mxu0 %v39
    %61 = vmatprep.subr.mxu0 0.0
    %62 = vmatpush1.msra.mxu0 0.0
    %63 = vmatprep.subr.mxu0 0.0
    %64 = vmatpush1.msra.mxu0 0.0
    %65 = vmatprep.subr.mxu0 0.0
    %66 = vmatpush1.msra.mxu0 0.0
    %67 = vmatprep.subr.mxu0 0.0
    %68 = vmatpush1.msra.mxu0 0.0
    %69 = vmatprep.subr.mxu0 0.0
    %70 = vmatpush1.msra.mxu0 0.0
    %71 = vmatprep.subr.mxu0 0.0
    %72 = vmatpush1.msra.mxu0 0.0
    %73 = vmatprep.subr.mxu0 0.0
    %74 = vmatpush1.msra.mxu0 0.0
    %75 = vmatprep.subr.mxu0 0.0
    %76 = vmatpush1.msra.mxu0 0.0
    %77 = vmatprep.subr.mxu0 0.0
    %78 = vmatpush1.msra.mxu0 0.0
    %79 = vmatprep.subr.mxu0 0.0
    %80 = vmatpush1.msra.mxu0 0.0
    %81 = vmatprep.subr.mxu0 0.0
    %82 = vmatpush1.msra.mxu0 0.0
    %83 = vmatprep.subr.mxu0 0.0
    %84 = vmatpush1.msra.mxu0 0.0
    %85 = vmatprep.subr.mxu0 0.0
    %86 = vmatpush1.msra.mxu0 0.0
    %87 = vmatprep.subr.mxu0 0.0
    %88 = vmatpush1.msra.mxu0 0.0
    %89 = vmatprep.subr.mxu0 0.0
    %90 = vmatpush1.msra.mxu0 0.0
    %91 = vmatprep.subr.mxu0 0.0
    %92 = vmatpush1.msra.mxu0 0.0
    %93 = vmatprep.subr.mxu0 0.0
    %94 = vmatpush1.msra.mxu0 0.0
    %95 = vmatprep.subr.mxu0 0.0
    %96 = vmatpush1.msra.mxu0 0.0
    %97 = vmatprep.subr.mxu0 0.0
    %98 = vmatpush1.msra.mxu0 0.0
    %99 = vmatprep.subr.mxu0 0.0
    %100 = vmatpush1.msra.mxu0 0.0
    %101 = vmatprep.subr.mxu0 0.0
    %102 = vmatpush1.msra.mxu0 0.0
    %103 = vmatprep.subr.mxu0 0.0
    %104 = vmatpush1.msra.mxu0 0.0
    %105 = vmatprep.subr.mxu0 0.0
    %106 = vmatpush1.msra.mxu0 0.0
    %107 = vmatprep.subr.mxu0 0.0
    %108 = vmatpush1.msra.mxu0 0.0
    %109 = vmatprep.subr.mxu0 0.0
    %110 = vmatpush1.msra.mxu0 0.0
    %111 = vmatprep.subr.mxu0 0.0
    %112 = vmatpush1.msra.mxu0 0.0
    %113 = vmatprep.subr.mxu0 0.0
    %114 = vmatpush1.msra.mxu0 0.0
    %115 = vmatprep.subr.mxu0 0.0
    %116 = vmatpush1.msra.mxu0 0.0
    %117 = vmatprep.subr.mxu0 0.0
    %118 = vmatpush1.msra.mxu0 0.0
    %119 = vmatprep.subr.mxu0 0.0
    %120 = vmatpush1.msra.mxu0 0.0
    %121 = vmatprep.mubr.f32.mxu0 0.0
    %122 = vmatmul.mubr.f32.gmra.mrb[0].mxu0 %v55
    %v123 = vpop.f32.mrb[0].mxu0
    %v124 = vadd.f32 %v52, %v123
    %v125 = vpop.f32.mrb[0].mxu0
    %126 = vdwg.mxu0
    %v127 = vmax.f32 %v124, 0.0
    %v128 = vlaneseq
    %v129 = vshrl.u32 %v128, 7
    %v130 = vsub.s32 0, %v129
    %v131 = vrot.slane %v47, %v130
    %vm132 = vcmask 195584
    %v134 = vsel %vm132, %v127, 0
    %136 = vmatprep.subr.mxu0 0.0
    %137 = vmatpush1.msra.mxu0 %v40
    %138 = vmatprep.subr.mxu0 0.0
    %139 = vmatpush1.msra.mxu0 %v41
    %140 = vmatprep.subr.mxu0 0.0
    %141 = vmatpush1.msra.mxu0 %v42
    %142 = vmatprep.subr.mxu0 0.0
    %143 = vmatpush1.msra.mxu0 0.0
    %144 = vmatprep.subr.mxu0 0.0
    %145 = vmatpush1.msra.mxu0 0.0
    %146 = vmatprep.subr.mxu0 0.0
    %147 = vmatpush1.msra.mxu0 0.0
    %148 = vmatprep.subr.mxu0 0.0
    %149 = vmatpush1.msra.mxu0 0.0
    %150 = vmatprep.subr.mxu0 0.0
    %151 = vmatpush1.msra.mxu0 0.0
    %152 = vmatprep.subr.mxu0 0.0
    %153 = vmatpush1.msra.mxu0 0.0
    %154 = vmatprep.subr.mxu0 0.0
    %155 = vmatpush1.msra.mxu0 0.0
    %156 = vmatprep.subr.mxu0 0.0
    %157 = vmatpush1.msra.mxu0 0.0
    %158 = vmatprep.subr.mxu0 0.0
    %159 = vmatpush1.msra.mxu0 0.0
    %160 = vmatprep.subr.mxu0 0.0
    %161 = vmatpush1.msra.mxu0 0.0
    %162 = vmatprep.subr.mxu0 0.0
    %163 = vmatpush1.msra.mxu0 0.0
    %164 = vmatprep.subr.mxu0 0.0
    %165 = vmatpush1.msra.mxu0 0.0
    %166 = vmatprep.subr.mxu0 0.0
    %167 = vmatpush1.msra.mxu0 0.0
    %168 = vmatprep.subr.mxu0 0.0
    %169 = vmatpush1.msra.mxu0 0.0
    %170 = vmatprep.subr.mxu0 0.0
    %171 = vmatpush1.msra.mxu0 0.0
    %172 = vmatprep.subr.mxu0 0.0
    %173 = vmatpush1.msra.mxu0 0.0
    %174 = vmatprep.subr.mxu0 0.0
    %175 = vmatpush1.msra.mxu0 0.0
    %176 = vmatprep.subr.mxu0 0.0
    %177 = vmatpush1.msra.mxu0 0.0
    %178 = vmatprep.subr.mxu0 0.0
    %179 = vmatpush1.msra.mxu0 0.0
    %180 = vmatprep.subr.mxu0 0.0
    %181 = vmatpush1.msra.mxu0 0.0
    %182 = vmatprep.subr.mxu0 0.0
    %183 = vmatpush1.msra.mxu0 0.0
    %184 = vmatprep.subr.mxu0 0.0
    %185 = vmatpush1.msra.mxu0 0.0
    %186 = vmatprep.subr.mxu0 0.0
    %187 = vmatpush1.msra.mxu0 0.0
    %188 = vmatprep.subr.mxu0 0.0
    %189 = vmatpush1.msra.mxu0 0.0
    %190 = vmatprep.subr.mxu0 0.0
    %191 = vmatpush1.msra.mxu0 0.0
    %192 = vmatprep.subr.mxu0 0.0
    %193 = vmatpush1.msra.mxu0 0.0
    %194 = vmatprep.subr.mxu0 0.0
    %195 = vmatpush1.msra.mxu0 0.0
    %196 = vmatprep.subr.mxu0 0.0
    %197 = vmatpush1.msra.mxu0 0.0
    %198 = vmatprep.subr.mxu0 0.0
    %199 = vmatpush1.msra.mxu0 0.0
    %200 = vmatprep.mubr.f32.mxu0 0.0
    %201 = vmatmul.mubr.f32.gmra.mrb[0].mxu0 %v134
    %v202 = vpop.f32.mrb[0].mxu0
    %v203 = vadd.f32 %v131, %v202
    %v204 = vpop.f32.mrb[0].mxu0
    %205 = vdwg.mxu0
    %v206 = vmax.f32 %v203, 0.0
    %v207 = vlaneseq
    %v208 = vshrl.u32 %v207, 7
    %v209 = vsub.s32 0, %v208
    %v210 = vrot.slane %v48, %v209
    %v212 = vsel %vm132, %v206, 0
    %214 = vmatprep.subr.mxu0 0.0
    %215 = vmatpush1.msra.mxu0 %v43
    %216 = vmatprep.subr.mxu0 0.0
    %217 = vmatpush1.msra.mxu0 %v44
    %218 = vmatprep.subr.mxu0 0.0
    %219 = vmatpush1.msra.mxu0 %v45
    %220 = vmatprep.subr.mxu0 0.0
    %221 = vmatpush1.msra.mxu0 0.0
    %222 = vmatprep.subr.mxu0 0.0
    %223 = vmatpush1.msra.mxu0 0.0
    %224 = vmatprep.subr.mxu0 0.0
    %225 = vmatpush1.msra.mxu0 0.0
    %226 = vmatprep.subr.mxu0 0.0
    %227 = vmatpush1.msra.mxu0 0.0
    %228 = vmatprep.subr.mxu0 0.0
    %229 = vmatpush1.msra.mxu0 0.0
    %230 = vmatprep.subr.mxu0 0.0
    %231 = vmatpush1.msra.mxu0 0.0
    %232 = vmatprep.subr.mxu0 0.0
    %233 = vmatpush1.msra.mxu0 0.0
    %234 = vmatprep.subr.mxu0 0.0
    %235 = vmatpush1.msra.mxu0 0.0
    %236 = vmatprep.subr.mxu0 0.0
    %237 = vmatpush1.msra.mxu0 0.0
    %238 = vmatprep.subr.mxu0 0.0
    %239 = vmatpush1.msra.mxu0 0.0
    %240 = vmatprep.subr.mxu0 0.0
    %241 = vmatpush1.msra.mxu0 0.0
    %242 = vmatprep.subr.mxu0 0.0
    %243 = vmatpush1.msra.mxu0 0.0
    %244 = vmatprep.subr.mxu0 0.0
    %245 = vmatpush1.msra.mxu0 0.0
    %246 = vmatprep.subr.mxu0 0.0
    %247 = vmatpush1.msra.mxu0 0.0
    %248 = vmatprep.subr.mxu0 0.0
    %249 = vmatpush1.msra.mxu0 0.0
    %250 = vmatprep.subr.mxu0 0.0
    %251 = vmatpush1.msra.mxu0 0.0
    %252 = vmatprep.subr.mxu0 0.0
    %253 = vmatpush1.msra.mxu0 0.0
    %254 = vmatprep.subr.mxu0 0.0
    %255 = vmatpush1.msra.mxu0 0.0
    %256 = vmatprep.subr.mxu0 0.0
    %257 = vmatpush1.msra.mxu0 0.0
    %258 = vmatprep.subr.mxu0 0.0
    %259 = vmatpush1.msra.mxu0 0.0
    %260 = vmatprep.subr.mxu0 0.0
    %261 = vmatpush1.msra.mxu0 0.0
    %262 = vmatprep.subr.mxu0 0.0
    %263 = vmatpush1.msra.mxu0 0.0
    %264 = vmatprep.subr.mxu0 0.0
    %265 = vmatpush1.msra.mxu0 0.0
    %266 = vmatprep.subr.mxu0 0.0
    %267 = vmatpush1.msra.mxu0 0.0
    %268 = vmatprep.subr.mxu0 0.0
    %269 = vmatpush1.msra.mxu0 0.0
    %270 = vmatprep.subr.mxu0 0.0
    %271 = vmatpush1.msra.mxu0 0.0
    %272 = vmatprep.subr.mxu0 0.0
    %273 = vmatpush1.msra.mxu0 0.0
    %274 = vmatprep.subr.mxu0 0.0
    %275 = vmatpush1.msra.mxu0 0.0
    %276 = vmatprep.subr.mxu0 0.0
    %277 = vmatpush1.msra.mxu0 0.0
    %278 = vmatprep.mubr.f32.mxu0 0.0
    %279 = vmatmul.mubr.f32.gmra.mrb[0].mxu0 %v212
    %v280 = vpop.f32.mrb[0].mxu0
    %v281 = vadd.f32 %v210, %v280
    %v282 = vpop.f32.mrb[0].mxu0
    %283 = vdwg.mxu0
    %vm284 = vcmask 31744
    %285 = vst.msk [vmem:[%s2] sm:$0xff] %vm284, %v281
    // Predicated region
    $region18: #{tpu_custom_call.1} parent=1 // pred_check
      _
    $region19: #{tpu_custom_call.1} parent=1 // pred_check_branch
      %287 = sbr.rel (0) target = $region21
    $region20: #{tpu_custom_call.1} parent=1 // pred_region
      _
    $region21: #{tpu_custom_call.1} parent=1 // pred_fallthru
      _
    // Predicated region
    $region22: #{tpu_custom_call.1} parent=1 // pred_check
      _
    $region23: #{tpu_custom_call.1} parent=1 // pred_check_branch
      %289 = sbr.rel (0) target = $region25
    $region24: #{tpu_custom_call.1} parent=1 // pred_region
      _
    $region25: #{tpu_custom_call.1} parent=1 // pred_fallthru
      _
    %290 = vsyncpa [#allocation3], 1
    %291 = vsyncpa [#allocation5], 1

</llo_original>
